<compile_context>
chip_gen: v5e
topology: v5e:2x2
jax: 0.10.0
libtpu: 0.0.40
codegen_flags: <defaults>
</compile_context>

<pallas_src>
import numpy as np
import jax
import jax.numpy as jnp
from jax.experimental import pallas as pl
from jax.experimental.pallas import tpu as pltpu


def _fmm_kernel(h_ref, u_ref, gr_ref, x_ref, o_ref):
    """Feedback-loop matrix: all mic pairs and all (kernel-side) freq bins in ONE step.

    Row index r = m*n_M + n on the sublane-dense flattened (m,n) axis; frequency is LAST
    (lane dim); re/im stacked on the leading axis.
      h_ref : (2, n_L, n_M*n_M, Fk)   row r -> H_LM[m, l, f]   (pre-repeated over n)
      u_ref : (2, n_L, n_M*n_M, Fk)   row r -> U[n, l, f]      (pre-tiled over m)
      gr_ref: (2, n_L, 1, Fk)         g[l] * R[l, f]
      x_ref : (2, n_M*n_M, Fk)        row r -> X[n, f]         (pre-tiled over m)
      o_ref : (2, n_M*n_M, Fk)        row r -> out[m, n, f]
    """
    n_L = h_ref.shape[1]
    n_MM = h_ref.shape[2]
    Fk = h_ref.shape[3]

    # Accumulate over the loudspeaker axis: only the (n_MM, Fk) accumulators stay live
    # across iterations, bounding the live-vreg count (~20) -> no spills.
    s_re = jnp.zeros((n_MM, Fk), jnp.float32)
    s_im = jnp.zeros((n_MM, Fk), jnp.float32)
    for l in range(n_L):                                  # static unroll, n_L <= 13
        h_re, h_im = h_ref[0, l], h_ref[1, l]             # (n_MM, Fk)
        gr_re, gr_im = gr_ref[0, l], gr_ref[1, l]         # (1, Fk) -> sublane broadcast
        # A[r, f] = H[m, l, f] * (g * R)[l, f]
        a_re = h_re * gr_re - h_im * gr_im
        a_im = h_re * gr_im + h_im * gr_re
        u_re, u_im = u_ref[0, l], u_ref[1, l]             # (n_MM, Fk)
        # S[r, f] += A[r, f] * U[n, l, f]
        s_re = s_re + (a_re * u_re - a_im * u_im)
        s_im = s_im + (a_re * u_im + a_im * u_re)

    # Fold X[n, f] after the loudspeaker reduction (commuting factor).
    x_re, x_im = x_ref[0], x_ref[1]
    # Dense, lane-full, unmasked stores: two (16, 128) planes.
    o_ref[0] = s_re * x_re - s_im * x_im
    o_ref[1] = s_re * x_im + s_im * x_re


def fmm_apply_planes(h_b, u_b, gr_b, x_b):
    """Apply the feedback-loop frequency-domain chain with a single-step Pallas kernel.

    h_b : (2, n_L, n_MM, Fk) f32   row r=m*n_M+n -> re/im of H_LM[m, l, f]
    u_b : (2, n_L, n_MM, Fk) f32   row r -> re/im of U[n, l, f]
    gr_b: (2, n_L, 1,   Fk)  f32   re/im of g[l] * R[l, f]
    x_b : (2, n_MM, Fk)      f32   row r -> re/im of X[n, f]
    returns (2, n_MM, Fk) f32 planes: row r -> re/im of out[m, n, f]
    """
    _, n_L, n_MM, Fk = h_b.shape
    vmem = pl.BlockSpec(memory_space=pltpu.MemorySpace.VMEM)  # whole array in VMEM, no grid
    return pl.pallas_call(
        _fmm_kernel,
        out_shape=jax.ShapeDtypeStruct((2, n_MM, Fk), jnp.float32),
        in_specs=[vmem, vmem, vmem, vmem],
        out_specs=vmem,
    )(h_b, u_b, gr_b, x_b)


class AAPallas:
    """JAX/Pallas port of AA. Parameters are deterministic synthetic stand-ins for the
    measured Otala RIRs / flamo module initializations (same shapes & normalizations)."""

    def __init__(self, n_S, n_M, n_L, n_A, fs=8000, nfft=256, FIR_order=32,
                 wgn_RT=0.05, rir_len=512, key=jax.random.PRNGKey(0)):
        assert n_S == 1, "Only one source is supported."
        assert n_L <= 13, "Only up to 13 loudspeakers are supported."
        assert n_M <= 4, "Only up to 4 microphones are supported."
        assert n_A == 1, "Only one audience member is supported."
        self.nfft = nfft
        self.n_M, self.n_L = n_M, n_L
        self.n_MM = n_M * n_M
        F = nfft // 2 + 1
        self.F = F
        # In-kernel frequency extent: largest multiple of 128 <= F (full F if F < 128).
        # The remaining bin(s) (the Nyquist bin for the usual even nfft) are done in JAX.
        self.Fk = (F // 128) * 128 if F >= 128 else F
        self.rem = F - self.Fk
        k1, k2, k3 = jax.random.split(key, 3)

        # Synthetic room impulse responses H_LM, frequency/time LAST, Frobenius-normalized.
        # TODO(synk): real kernels would load measured Otala RIRs from disk; synthetic here.
        t = jnp.arange(rir_len, dtype=jnp.float32)
        env = jnp.exp(-6.91 * t / (0.3 * fs))
        rirs = jax.random.normal(k1, (n_M, n_L, rir_len), jnp.float32) * env[None, None, :]
        rirs = rirs / jnp.linalg.norm(rirs)
        self.H_LM_t = rirs                                                # (n_M, n_L, rir_len)

        # Trainable FIR matrix U (module convention (FIR_order, n_L, n_M)); stored as u[n,l,t].
        self.U_t = jax.random.normal(k2, (n_M, n_L, FIR_order), jnp.float32) / FIR_order

        # WGN reverb R: per-loudspeaker exponentially decaying white noise, t60 = wgn_RT.
        wgn_len = max(int(wgn_RT * fs), 8)
        tw = jnp.arange(wgn_len, dtype=jnp.float32)
        wenv = 10.0 ** (-3.0 * tw / (wgn_RT * fs))                        # -60 dB at t60
        wgn = jax.random.normal(k3, (n_L, wgn_len), jnp.float32) * wenv[None, :]
        self.R_t = wgn / jnp.sqrt(jnp.sum(wenv ** 2))                     # (n_L, wgn_len)

        # Full complex frequency responses (tiny; kept for the tail bins).
        self.H_fc = jnp.fft.rfft(self.H_LM_t, n=nfft, axis=-1)           # (n_M, n_L, F)  H[m,l,f]
        self.U_fc = jnp.fft.rfft(self.U_t, n=nfft, axis=-1)              # (n_M, n_L, F)  U[n,l,f]
        self.R_fc = jnp.fft.rfft(self.R_t, n=nfft, axis=-1)              # (n_L, F)       R[l,f]

        def stack_ri(a_c):
            return jnp.stack([jnp.real(a_c), jnp.imag(a_c)], axis=0).astype(jnp.float32)

        # Kernel layouts: frequency LAST (lane); (m,n) flattened to a sublane-dense axis of
        # length n_M*n_M with row r = m*n_M + n. One-time layout plumbing in XLA.
        Fk = self.Fk
        h_t = jnp.transpose(stack_ri(self.H_fc[..., :Fk]), (0, 2, 1, 3))  # (2, n_L, n_M, Fk)
        u_t = jnp.transpose(stack_ri(self.U_fc[..., :Fk]), (0, 2, 1, 3))  # (2, n_L, n_M, Fk)
        self.h_b = jnp.repeat(h_t, n_M, axis=2)                 # row r -> m   (2, n_L, n_MM, Fk)
        self.u_b = jnp.tile(u_t, (1, 1, n_M, 1))                # row r -> n   (2, n_L, n_MM, Fk)
        self.r_b = stack_ri(self.R_fc[..., :Fk])[:, :, None, :]            # (2, n_L, 1, Fk)

        # set_G_to_GBI(): feedback matrix at G=1 with identity input, g = 1 / max |eigenvalue|.
        ones_x = jnp.concatenate(
            [jnp.ones((1, self.n_MM, Fk), jnp.float32),
             jnp.zeros((1, self.n_MM, Fk), jnp.float32)], axis=0)
        planes = fmm_apply_planes(self.h_b, self.u_b, self.r_b, ones_x)
        ones_g = jnp.ones((n_L,), jnp.float32)
        ones_Xc = jnp.ones((n_M, F), jnp.complex64)
        T_np = self._assemble_numpy(planes, ones_g, ones_Xc)               # (F, n_M, n_M)
        # TODO(synk): general complex eigendecomposition is not a TPU op; CPU/numpy glue.
        evs = np.linalg.eigvals(T_np)
        gbi = 1.0 / float(np.max(np.abs(evs)))
        self.G = gbi * jnp.ones((n_L,), jnp.float32)

    def _tail(self, g, X_fc):
        """Remaining frequency bins (f >= Fk, e.g. the Nyquist bin) computed in plain JAX."""
        if self.rem == 0:
            return jnp.zeros((0, self.n_M, self.n_M), jnp.complex64)
        Ht = self.H_fc[..., self.Fk:]          # (n_M, n_L, rem)
        Ut = self.U_fc[..., self.Fk:]          # (n_M, n_L, rem)
        Rt = self.R_fc[..., self.Fk:]          # (n_L, rem)
        Xt = X_fc[..., self.Fk:]               # (n_M, rem)
        return jnp.einsum('mlf,l,lf,nlf,nf->fmn',
                          Ht, g.astype(jnp.complex64), Rt, Ut, Xt)

    def _assemble_numpy(self, planes, g, X_fc):
        """Assemble (F, n_M, n_M) complex on CPU (GBI path -> numpy eig anyway)."""
        main = np.asarray(jax.device_get(planes))
        main_c = (main[0] + 1j * main[1]).reshape(self.n_M, self.n_M, self.Fk)
        main_c = np.transpose(main_c, (2, 0, 1))                           # (Fk, n_M, n_M)
        tail_c = np.asarray(jax.device_get(self._tail(g, X_fc)))
        return np.concatenate([main_c, tail_c], axis=0).astype(np.complex64)

    def forward(self, x):
        """x: (T, n_M) real time-domain signal (e.g. unit impulses per mic channel).
        Returns (F, n_M, n_M) complex64 feedback-loop matrix response."""
        X_fc = jnp.fft.rfft(x.astype(jnp.float32).T, n=self.nfft, axis=-1)          # (n_M, F)
        xs = jnp.stack([jnp.real(X_fc[:, :self.Fk]),
                        jnp.imag(X_fc[:, :self.Fk])], axis=0).astype(jnp.float32)   # (2,n_M,Fk)
        x_b = jnp.tile(xs, (1, self.n_M, 1))                                        # (2,n_MM,Fk)
        gr_b = self.r_b * self.G[None, :, None, None]                               # (2,n_L,1,Fk)
        planes = fmm_apply_planes(self.h_b, self.u_b, gr_b, x_b)                    # (2,n_MM,Fk)
        # The complex assemble + tiny transpose below is API plumbing for parity with the
        # torch module; perf-critical consumers should consume the raw planes (as GBI does).
        main_c = (planes[0] + 1j * planes[1]).astype(jnp.complex64)
        main_c = jnp.transpose(main_c.reshape(self.n_M, self.n_M, self.Fk), (2, 0, 1))
        if self.rem == 0:
            return main_c
        tail_c = self._tail(self.G, X_fc)
        return jnp.concatenate([main_c, tail_c], axis=0)


if __name__ == "__main__":
    key = jax.random.PRNGKey(0)
    n_S, n_M, n_L, n_A = 1, 4, 8, 1
    fs, nfft = 8000, 256
    model = AAPallas(n_S, n_M, n_L, n_A, fs=fs, nfft=nfft,
                     FIR_order=32, wgn_RT=0.05, rir_len=512, key=key)

    # Diagonal matrix of unit impulses (usage mode 2 of AA.forward): x is (T, n_M),
    # diag_embed + FFT happen in the input layer -> output is the feedback-loop matrix.
    T = nfft
    x = jnp.zeros((T, n_M), jnp.float32).at[0, :].set(1.0)

    y = model.forward(x)
    y = jax.block_until_ready(y)

    assert y.shape == (nfft // 2 + 1, n_M, n_M), y.shape
    assert y.dtype == jnp.complex64
    assert bool(jnp.all(jnp.isfinite(jnp.abs(y))))
    print("KERNEL_OK")
</pallas_src>

<mosaic_0001>
module attributes {stable_mosaic.version = 11 : i64} {
  func.func @_fmm_kernel(%arg0: memref<2x8x16x128xf32, #tpu.memory_space<vmem>>, %arg1: memref<2x8x16x128xf32, #tpu.memory_space<vmem>>, %arg2: memref<2x8x1x128xf32, #tpu.memory_space<vmem>>, %arg3: memref<2x16x128xf32, #tpu.memory_space<vmem>>, %arg4: memref<2x16x128xf32, #tpu.memory_space<vmem>>) attributes {dimension_semantics = [], scalar_prefetch = 0 : i64, scratch_operands = 0 : i64, tpu.core_type = #tpu.core_type<tc>} {
    %cst = arith.constant 0.000000e+00 : f32
    %0 = vector.broadcast %cst : f32 to vector<16x128xf32>
    %cst_0 = arith.constant 0.000000e+00 : f32
    %1 = vector.broadcast %cst_0 : f32 to vector<16x128xf32>
    %c0 = arith.constant 0 : index
    %c0_1 = arith.constant 0 : index
    %c0_2 = arith.constant 0 : index
    %c0_3 = arith.constant 0 : index
    %2 = vector.load %arg0[%c0, %c0_1, %c0_2, %c0_3] : memref<2x8x16x128xf32, #tpu.memory_space<vmem>>, vector<1x1x16x128xf32>
    %3 = vector.shape_cast %2 : vector<1x1x16x128xf32> to vector<16x128xf32>
    %c1 = arith.constant 1 : index
    %c0_4 = arith.constant 0 : index
    %c0_5 = arith.constant 0 : index
    %c0_6 = arith.constant 0 : index
    %4 = vector.load %arg0[%c1, %c0_4, %c0_5, %c0_6] : memref<2x8x16x128xf32, #tpu.memory_space<vmem>>, vector<1x1x16x128xf32>
    %5 = vector.shape_cast %4 : vector<1x1x16x128xf32> to vector<16x128xf32>
    %c0_7 = arith.constant 0 : index
    %c0_8 = arith.constant 0 : index
    %c0_9 = arith.constant 0 : index
    %c0_10 = arith.constant 0 : index
    %6 = vector.load %arg2[%c0_7, %c0_8, %c0_9, %c0_10] : memref<2x8x1x128xf32, #tpu.memory_space<vmem>>, vector<1x1x1x128xf32>
    %7 = vector.shape_cast %6 : vector<1x1x1x128xf32> to vector<1x128xf32>
    %c1_11 = arith.constant 1 : index
    %c0_12 = arith.constant 0 : index
    %c0_13 = arith.constant 0 : index
    %c0_14 = arith.constant 0 : index
    %8 = vector.load %arg2[%c1_11, %c0_12, %c0_13, %c0_14] : memref<2x8x1x128xf32, #tpu.memory_space<vmem>>, vector<1x1x1x128xf32>
    %9 = vector.shape_cast %8 : vector<1x1x1x128xf32> to vector<1x128xf32>
    %10 = vector.broadcast %7 : vector<1x128xf32> to vector<16x128xf32>
    %11 = arith.mulf %3, %10 : vector<16x128xf32>
    %12 = vector.broadcast %9 : vector<1x128xf32> to vector<16x128xf32>
    %13 = arith.mulf %5, %12 : vector<16x128xf32>
    %14 = arith.subf %11, %13 : vector<16x128xf32>
    %15 = vector.broadcast %9 : vector<1x128xf32> to vector<16x128xf32>
    %16 = arith.mulf %3, %15 : vector<16x128xf32>
    %17 = vector.broadcast %7 : vector<1x128xf32> to vector<16x128xf32>
    %18 = arith.mulf %5, %17 : vector<16x128xf32>
    %19 = arith.addf %16, %18 : vector<16x128xf32>
    %c0_15 = arith.constant 0 : index
    %c0_16 = arith.constant 0 : index
    %c0_17 = arith.constant 0 : index
    %c0_18 = arith.constant 0 : index
    %20 = vector.load %arg1[%c0_15, %c0_16, %c0_17, %c0_18] : memref<2x8x16x128xf32, #tpu.memory_space<vmem>>, vector<1x1x16x128xf32>
    %21 = vector.shape_cast %20 : vector<1x1x16x128xf32> to vector<16x128xf32>
    %c1_19 = arith.constant 1 : index
    %c0_20 = arith.constant 0 : index
    %c0_21 = arith.constant 0 : index
    %c0_22 = arith.constant 0 : index
    %22 = vector.load %arg1[%c1_19, %c0_20, %c0_21, %c0_22] : memref<2x8x16x128xf32, #tpu.memory_space<vmem>>, vector<1x1x16x128xf32>
    %23 = vector.shape_cast %22 : vector<1x1x16x128xf32> to vector<16x128xf32>
    %24 = arith.mulf %14, %21 : vector<16x128xf32>
    %25 = arith.mulf %19, %23 : vector<16x128xf32>
    %26 = arith.subf %24, %25 : vector<16x128xf32>
    %27 = arith.addf %0, %26 : vector<16x128xf32>
    %28 = arith.mulf %14, %23 : vector<16x128xf32>
    %29 = arith.mulf %19, %21 : vector<16x128xf32>
    %30 = arith.addf %28, %29 : vector<16x128xf32>
    %31 = arith.addf %1, %30 : vector<16x128xf32>
    %c0_23 = arith.constant 0 : index
    %c1_24 = arith.constant 1 : index
    %c0_25 = arith.constant 0 : index
    %c0_26 = arith.constant 0 : index
    %32 = vector.load %arg0[%c0_23, %c1_24, %c0_25, %c0_26] : memref<2x8x16x128xf32, #tpu.memory_space<vmem>>, vector<1x1x16x128xf32>
    %33 = vector.shape_cast %32 : vector<1x1x16x128xf32> to vector<16x128xf32>
    %c1_27 = arith.constant 1 : index
    %c1_28 = arith.constant 1 : index
    %c0_29 = arith.constant 0 : index
    %c0_30 = arith.constant 0 : index
    %34 = vector.load %arg0[%c1_27, %c1_28, %c0_29, %c0_30] : memref<2x8x16x128xf32, #tpu.memory_space<vmem>>, vector<1x1x16x128xf32>
    %35 = vector.shape_cast %34 : vector<1x1x16x128xf32> to vector<16x128xf32>
    %c0_31 = arith.constant 0 : index
    %c1_32 = arith.constant 1 : index
    %c0_33 = arith.constant 0 : index
    %c0_34 = arith.constant 0 : index
    %36 = vector.load %arg2[%c0_31, %c1_32, %c0_33, %c0_34] : memref<2x8x1x128xf32, #tpu.memory_space<vmem>>, vector<1x1x1x128xf32>
    %37 = vector.shape_cast %36 : vector<1x1x1x128xf32> to vector<1x128xf32>
    %c1_35 = arith.constant 1 : index
    %c1_36 = arith.constant 1 : index
    %c0_37 = arith.constant 0 : index
    %c0_38 = arith.constant 0 : index
    %38 = vector.load %arg2[%c1_35, %c1_36, %c0_37, %c0_38] : memref<2x8x1x128xf32, #tpu.memory_space<vmem>>, vector<1x1x1x128xf32>
    %39 = vector.shape_cast %38 : vector<1x1x1x128xf32> to vector<1x128xf32>
    %40 = vector.broadcast %37 : vector<1x128xf32> to vector<16x128xf32>
    %41 = arith.mulf %33, %40 : vector<16x128xf32>
    %42 = vector.broadcast %39 : vector<1x128xf32> to vector<16x128xf32>
    %43 = arith.mulf %35, %42 : vector<16x128xf32>
    %44 = arith.subf %41, %43 : vector<16x128xf32>
    %45 = vector.broadcast %39 : vector<1x128xf32> to vector<16x128xf32>
    %46 = arith.mulf %33, %45 : vector<16x128xf32>
    %47 = vector.broadcast %37 : vector<1x128xf32> to vector<16x128xf32>
    %48 = arith.mulf %35, %47 : vector<16x128xf32>
    %49 = arith.addf %46, %48 : vector<16x128xf32>
    %c0_39 = arith.constant 0 : index
    %c1_40 = arith.constant 1 : index
    %c0_41 = arith.constant 0 : index
    %c0_42 = arith.constant 0 : index
    %50 = vector.load %arg1[%c0_39, %c1_40, %c0_41, %c0_42] : memref<2x8x16x128xf32, #tpu.memory_space<vmem>>, vector<1x1x16x128xf32>
    %51 = vector.shape_cast %50 : vector<1x1x16x128xf32> to vector<16x128xf32>
    %c1_43 = arith.constant 1 : index
    %c1_44 = arith.constant 1 : index
    %c0_45 = arith.constant 0 : index
    %c0_46 = arith.constant 0 : index
    %52 = vector.load %arg1[%c1_43, %c1_44, %c0_45, %c0_46] : memref<2x8x16x128xf32, #tpu.memory_space<vmem>>, vector<1x1x16x128xf32>
    %53 = vector.shape_cast %52 : vector<1x1x16x128xf32> to vector<16x128xf32>
    %54 = arith.mulf %44, %51 : vector<16x128xf32>
    %55 = arith.mulf %49, %53 : vector<16x128xf32>
    %56 = arith.subf %54, %55 : vector<16x128xf32>
    %57 = arith.addf %27, %56 : vector<16x128xf32>
    %58 = arith.mulf %44, %53 : vector<16x128xf32>
    %59 = arith.mulf %49, %51 : vector<16x128xf32>
    %60 = arith.addf %58, %59 : vector<16x128xf32>
    %61 = arith.addf %31, %60 : vector<16x128xf32>
    %c0_47 = arith.constant 0 : index
    %c2 = arith.constant 2 : index
    %c0_48 = arith.constant 0 : index
    %c0_49 = arith.constant 0 : index
    %62 = vector.load %arg0[%c0_47, %c2, %c0_48, %c0_49] : memref<2x8x16x128xf32, #tpu.memory_space<vmem>>, vector<1x1x16x128xf32>
    %63 = vector.shape_cast %62 : vector<1x1x16x128xf32> to vector<16x128xf32>
    %c1_50 = arith.constant 1 : index
    %c2_51 = arith.constant 2 : index
    %c0_52 = arith.constant 0 : index
    %c0_53 = arith.constant 0 : index
    %64 = vector.load %arg0[%c1_50, %c2_51, %c0_52, %c0_53] : memref<2x8x16x128xf32, #tpu.memory_space<vmem>>, vector<1x1x16x128xf32>
    %65 = vector.shape_cast %64 : vector<1x1x16x128xf32> to vector<16x128xf32>
    %c0_54 = arith.constant 0 : index
    %c2_55 = arith.constant 2 : index
    %c0_56 = arith.constant 0 : index
    %c0_57 = arith.constant 0 : index
    %66 = vector.load %arg2[%c0_54, %c2_55, %c0_56, %c0_57] : memref<2x8x1x128xf32, #tpu.memory_space<vmem>>, vector<1x1x1x128xf32>
    %67 = vector.shape_cast %66 : vector<1x1x1x128xf32> to vector<1x128xf32>
    %c1_58 = arith.constant 1 : index
    %c2_59 = arith.constant 2 : index
    %c0_60 = arith.constant 0 : index
    %c0_61 = arith.constant 0 : index
    %68 = vector.load %arg2[%c1_58, %c2_59, %c0_60, %c0_61] : memref<2x8x1x128xf32, #tpu.memory_space<vmem>>, vector<1x1x1x128xf32>
    %69 = vector.shape_cast %68 : vector<1x1x1x128xf32> to vector<1x128xf32>
    %70 = vector.broadcast %67 : vector<1x128xf32> to vector<16x128xf32>
    %71 = arith.mulf %63, %70 : vector<16x128xf32>
    %72 = vector.broadcast %69 : vector<1x128xf32> to vector<16x128xf32>
    %73 = arith.mulf %65, %72 : vector<16x128xf32>
    %74 = arith.subf %71, %73 : vector<16x128xf32>
    %75 = vector.broadcast %69 : vector<1x128xf32> to vector<16x128xf32>
    %76 = arith.mulf %63, %75 : vector<16x128xf32>
    %77 = vector.broadcast %67 : vector<1x128xf32> to vector<16x128xf32>
    %78 = arith.mulf %65, %77 : vector<16x128xf32>
    %79 = arith.addf %76, %78 : vector<16x128xf32>
    %c0_62 = arith.constant 0 : index
    %c2_63 = arith.constant 2 : index
    %c0_64 = arith.constant 0 : index
    %c0_65 = arith.constant 0 : index
    %80 = vector.load %arg1[%c0_62, %c2_63, %c0_64, %c0_65] : memref<2x8x16x128xf32, #tpu.memory_space<vmem>>, vector<1x1x16x128xf32>
    %81 = vector.shape_cast %80 : vector<1x1x16x128xf32> to vector<16x128xf32>
    %c1_66 = arith.constant 1 : index
    %c2_67 = arith.constant 2 : index
    %c0_68 = arith.constant 0 : index
    %c0_69 = arith.constant 0 : index
    %82 = vector.load %arg1[%c1_66, %c2_67, %c0_68, %c0_69] : memref<2x8x16x128xf32, #tpu.memory_space<vmem>>, vector<1x1x16x128xf32>
    %83 = vector.shape_cast %82 : vector<1x1x16x128xf32> to vector<16x128xf32>
    %84 = arith.mulf %74, %81 : vector<16x128xf32>
    %85 = arith.mulf %79, %83 : vector<16x128xf32>
    %86 = arith.subf %84, %85 : vector<16x128xf32>
    %87 = arith.addf %57, %86 : vector<16x128xf32>
    %88 = arith.mulf %74, %83 : vector<16x128xf32>
    %89 = arith.mulf %79, %81 : vector<16x128xf32>
    %90 = arith.addf %88, %89 : vector<16x128xf32>
    %91 = arith.addf %61, %90 : vector<16x128xf32>
    %c0_70 = arith.constant 0 : index
    %c3 = arith.constant 3 : index
    %c0_71 = arith.constant 0 : index
    %c0_72 = arith.constant 0 : index
    %92 = vector.load %arg0[%c0_70, %c3, %c0_71, %c0_72] : memref<2x8x16x128xf32, #tpu.memory_space<vmem>>, vector<1x1x16x128xf32>
    %93 = vector.shape_cast %92 : vector<1x1x16x128xf32> to vector<16x128xf32>
    %c1_73 = arith.constant 1 : index
    %c3_74 = arith.constant 3 : index
    %c0_75 = arith.constant 0 : index
    %c0_76 = arith.constant 0 : index
    %94 = vector.load %arg0[%c1_73, %c3_74, %c0_75, %c0_76] : memref<2x8x16x128xf32, #tpu.memory_space<vmem>>, vector<1x1x16x128xf32>
    %95 = vector.shape_cast %94 : vector<1x1x16x128xf32> to vector<16x128xf32>
    %c0_77 = arith.constant 0 : index
    %c3_78 = arith.constant 3 : index
    %c0_79 = arith.constant 0 : index
    %c0_80 = arith.constant 0 : index
    %96 = vector.load %arg2[%c0_77, %c3_78, %c0_79, %c0_80] : memref<2x8x1x128xf32, #tpu.memory_space<vmem>>, vector<1x1x1x128xf32>
    %97 = vector.shape_cast %96 : vector<1x1x1x128xf32> to vector<1x128xf32>
    %c1_81 = arith.constant 1 : index
    %c3_82 = arith.constant 3 : index
    %c0_83 = arith.constant 0 : index
    %c0_84 = arith.constant 0 : index
    %98 = vector.load %arg2[%c1_81, %c3_82, %c0_83, %c0_84] : memref<2x8x1x128xf32, #tpu.memory_space<vmem>>, vector<1x1x1x128xf32>
    %99 = vector.shape_cast %98 : vector<1x1x1x128xf32> to vector<1x128xf32>
    %100 = vector.broadcast %97 : vector<1x128xf32> to vector<16x128xf32>
    %101 = arith.mulf %93, %100 : vector<16x128xf32>
    %102 = vector.broadcast %99 : vector<1x128xf32> to vector<16x128xf32>
    %103 = arith.mulf %95, %102 : vector<16x128xf32>
    %104 = arith.subf %101, %103 : vector<16x128xf32>
    %105 = vector.broadcast %99 : vector<1x128xf32> to vector<16x128xf32>
    %106 = arith.mulf %93, %105 : vector<16x128xf32>
    %107 = vector.broadcast %97 : vector<1x128xf32> to vector<16x128xf32>
    %108 = arith.mulf %95, %107 : vector<16x128xf32>
    %109 = arith.addf %106, %108 : vector<16x128xf32>
    %c0_85 = arith.constant 0 : index
    %c3_86 = arith.constant 3 : index
    %c0_87 = arith.constant 0 : index
    %c0_88 = arith.constant 0 : index
    %110 = vector.load %arg1[%c0_85, %c3_86, %c0_87, %c0_88] : memref<2x8x16x128xf32, #tpu.memory_space<vmem>>, vector<1x1x16x128xf32>
    %111 = vector.shape_cast %110 : vector<1x1x16x128xf32> to vector<16x128xf32>
    %c1_89 = arith.constant 1 : index
    %c3_90 = arith.constant 3 : index
    %c0_91 = arith.constant 0 : index
    %c0_92 = arith.constant 0 : index
    %112 = vector.load %arg1[%c1_89, %c3_90, %c0_91, %c0_92] : memref<2x8x16x128xf32, #tpu.memory_space<vmem>>, vector<1x1x16x128xf32>
    %113 = vector.shape_cast %112 : vector<1x1x16x128xf32> to vector<16x128xf32>
    %114 = arith.mulf %104, %111 : vector<16x128xf32>
    %115 = arith.mulf %109, %113 : vector<16x128xf32>
    %116 = arith.subf %114, %115 : vector<16x128xf32>
    %117 = arith.addf %87, %116 : vector<16x128xf32>
    %118 = arith.mulf %104, %113 : vector<16x128xf32>
    %119 = arith.mulf %109, %111 : vector<16x128xf32>
    %120 = arith.addf %118, %119 : vector<16x128xf32>
    %121 = arith.addf %91, %120 : vector<16x128xf32>
    %c0_93 = arith.constant 0 : index
    %c4 = arith.constant 4 : index
    %c0_94 = arith.constant 0 : index
    %c0_95 = arith.constant 0 : index
    %122 = vector.load %arg0[%c0_93, %c4, %c0_94, %c0_95] : memref<2x8x16x128xf32, #tpu.memory_space<vmem>>, vector<1x1x16x128xf32>
    %123 = vector.shape_cast %122 : vector<1x1x16x128xf32> to vector<16x128xf32>
    %c1_96 = arith.constant 1 : index
    %c4_97 = arith.constant 4 : index
    %c0_98 = arith.constant 0 : index
    %c0_99 = arith.constant 0 : index
    %124 = vector.load %arg0[%c1_96, %c4_97, %c0_98, %c0_99] : memref<2x8x16x128xf32, #tpu.memory_space<vmem>>, vector<1x1x16x128xf32>
    %125 = vector.shape_cast %124 : vector<1x1x16x128xf32> to vector<16x128xf32>
    %c0_100 = arith.constant 0 : index
    %c4_101 = arith.constant 4 : index
    %c0_102 = arith.constant 0 : index
    %c0_103 = arith.constant 0 : index
    %126 = vector.load %arg2[%c0_100, %c4_101, %c0_102, %c0_103] : memref<2x8x1x128xf32, #tpu.memory_space<vmem>>, vector<1x1x1x128xf32>
    %127 = vector.shape_cast %126 : vector<1x1x1x128xf32> to vector<1x128xf32>
    %c1_104 = arith.constant 1 : index
    %c4_105 = arith.constant 4 : index
    %c0_106 = arith.constant 0 : index
    %c0_107 = arith.constant 0 : index
    %128 = vector.load %arg2[%c1_104, %c4_105, %c0_106, %c0_107] : memref<2x8x1x128xf32, #tpu.memory_space<vmem>>, vector<1x1x1x128xf32>
    %129 = vector.shape_cast %128 : vector<1x1x1x128xf32> to vector<1x128xf32>
    %130 = vector.broadcast %127 : vector<1x128xf32> to vector<16x128xf32>
    %131 = arith.mulf %123, %130 : vector<16x128xf32>
    %132 = vector.broadcast %129 : vector<1x128xf32> to vector<16x128xf32>
    %133 = arith.mulf %125, %132 : vector<16x128xf32>
    %134 = arith.subf %131, %133 : vector<16x128xf32>
    %135 = vector.broadcast %129 : vector<1x128xf32> to vector<16x128xf32>
    %136 = arith.mulf %123, %135 : vector<16x128xf32>
    %137 = vector.broadcast %127 : vector<1x128xf32> to vector<16x128xf32>
    %138 = arith.mulf %125, %137 : vector<16x128xf32>
    %139 = arith.addf %136, %138 : vector<16x128xf32>
    %c0_108 = arith.constant 0 : index
    %c4_109 = arith.constant 4 : index
    %c0_110 = arith.constant 0 : index
    %c0_111 = arith.constant 0 : index
    %140 = vector.load %arg1[%c0_108, %c4_109, %c0_110, %c0_111] : memref<2x8x16x128xf32, #tpu.memory_space<vmem>>, vector<1x1x16x128xf32>
    %141 = vector.shape_cast %140 : vector<1x1x16x128xf32> to vector<16x128xf32>
    %c1_112 = arith.constant 1 : index
    %c4_113 = arith.constant 4 : index
    %c0_114 = arith.constant 0 : index
    %c0_115 = arith.constant 0 : index
    %142 = vector.load %arg1[%c1_112, %c4_113, %c0_114, %c0_115] : memref<2x8x16x128xf32, #tpu.memory_space<vmem>>, vector<1x1x16x128xf32>
    %143 = vector.shape_cast %142 : vector<1x1x16x128xf32> to vector<16x128xf32>
    %144 = arith.mulf %134, %141 : vector<16x128xf32>
    %145 = arith.mulf %139, %143 : vector<16x128xf32>
    %146 = arith.subf %144, %145 : vector<16x128xf32>
    %147 = arith.addf %117, %146 : vector<16x128xf32>
    %148 = arith.mulf %134, %143 : vector<16x128xf32>
    %149 = arith.mulf %139, %141 : vector<16x128xf32>
    %150 = arith.addf %148, %149 : vector<16x128xf32>
    %151 = arith.addf %121, %150 : vector<16x128xf32>
    %c0_116 = arith.constant 0 : index
    %c5 = arith.constant 5 : index
    %c0_117 = arith.constant 0 : index
    %c0_118 = arith.constant 0 : index
    %152 = vector.load %arg0[%c0_116, %c5, %c0_117, %c0_118] : memref<2x8x16x128xf32, #tpu.memory_space<vmem>>, vector<1x1x16x128xf32>
    %153 = vector.shape_cast %152 : vector<1x1x16x128xf32> to vector<16x128xf32>
    %c1_119 = arith.constant 1 : index
    %c5_120 = arith.constant 5 : index
    %c0_121 = arith.constant 0 : index
    %c0_122 = arith.constant 0 : index
    %154 = vector.load %arg0[%c1_119, %c5_120, %c0_121, %c0_122] : memref<2x8x16x128xf32, #tpu.memory_space<vmem>>, vector<1x1x16x128xf32>
    %155 = vector.shape_cast %154 : vector<1x1x16x128xf32> to vector<16x128xf32>
    %c0_123 = arith.constant 0 : index
    %c5_124 = arith.constant 5 : index
    %c0_125 = arith.constant 0 : index
    %c0_126 = arith.constant 0 : index
    %156 = vector.load %arg2[%c0_123, %c5_124, %c0_125, %c0_126] : memref<2x8x1x128xf32, #tpu.memory_space<vmem>>, vector<1x1x1x128xf32>
    %157 = vector.shape_cast %156 : vector<1x1x1x128xf32> to vector<1x128xf32>
    %c1_127 = arith.constant 1 : index
    %c5_128 = arith.constant 5 : index
    %c0_129 = arith.constant 0 : index
    %c0_130 = arith.constant 0 : index
    %158 = vector.load %arg2[%c1_127, %c5_128, %c0_129, %c0_130] : memref<2x8x1x128xf32, #tpu.memory_space<vmem>>, vector<1x1x1x128xf32>
    %159 = vector.shape_cast %158 : vector<1x1x1x128xf32> to vector<1x128xf32>
    %160 = vector.broadcast %157 : vector<1x128xf32> to vector<16x128xf32>
    %161 = arith.mulf %153, %160 : vector<16x128xf32>
    %162 = vector.broadcast %159 : vector<1x128xf32> to vector<16x128xf32>
    %163 = arith.mulf %155, %162 : vector<16x128xf32>
    %164 = arith.subf %161, %163 : vector<16x128xf32>
    %165 = vector.broadcast %159 : vector<1x128xf32> to vector<16x128xf32>
    %166 = arith.mulf %153, %165 : vector<16x128xf32>
    %167 = vector.broadcast %157 : vector<1x128xf32> to vector<16x128xf32>
    %168 = arith.mulf %155, %167 : vector<16x128xf32>
    %169 = arith.addf %166, %168 : vector<16x128xf32>
    %c0_131 = arith.constant 0 : index
    %c5_132 = arith.constant 5 : index
    %c0_133 = arith.constant 0 : index
    %c0_134 = arith.constant 0 : index
    %170 = vector.load %arg1[%c0_131, %c5_132, %c0_133, %c0_134] : memref<2x8x16x128xf32, #tpu.memory_space<vmem>>, vector<1x1x16x128xf32>
    %171 = vector.shape_cast %170 : vector<1x1x16x128xf32> to vector<16x128xf32>
    %c1_135 = arith.constant 1 : index
    %c5_136 = arith.constant 5 : index
    %c0_137 = arith.constant 0 : index
    %c0_138 = arith.constant 0 : index
    %172 = vector.load %arg1[%c1_135, %c5_136, %c0_137, %c0_138] : memref<2x8x16x128xf32, #tpu.memory_space<vmem>>, vector<1x1x16x128xf32>
    %173 = vector.shape_cast %172 : vector<1x1x16x128xf32> to vector<16x128xf32>
    %174 = arith.mulf %164, %171 : vector<16x128xf32>
    %175 = arith.mulf %169, %173 : vector<16x128xf32>
    %176 = arith.subf %174, %175 : vector<16x128xf32>
    %177 = arith.addf %147, %176 : vector<16x128xf32>
    %178 = arith.mulf %164, %173 : vector<16x128xf32>
    %179 = arith.mulf %169, %171 : vector<16x128xf32>
    %180 = arith.addf %178, %179 : vector<16x128xf32>
    %181 = arith.addf %151, %180 : vector<16x128xf32>
    %c0_139 = arith.constant 0 : index
    %c6 = arith.constant 6 : index
    %c0_140 = arith.constant 0 : index
    %c0_141 = arith.constant 0 : index
    %182 = vector.load %arg0[%c0_139, %c6, %c0_140, %c0_141] : memref<2x8x16x128xf32, #tpu.memory_space<vmem>>, vector<1x1x16x128xf32>
    %183 = vector.shape_cast %182 : vector<1x1x16x128xf32> to vector<16x128xf32>
    %c1_142 = arith.constant 1 : index
    %c6_143 = arith.constant 6 : index
    %c0_144 = arith.constant 0 : index
    %c0_145 = arith.constant 0 : index
    %184 = vector.load %arg0[%c1_142, %c6_143, %c0_144, %c0_145] : memref<2x8x16x128xf32, #tpu.memory_space<vmem>>, vector<1x1x16x128xf32>
    %185 = vector.shape_cast %184 : vector<1x1x16x128xf32> to vector<16x128xf32>
    %c0_146 = arith.constant 0 : index
    %c6_147 = arith.constant 6 : index
    %c0_148 = arith.constant 0 : index
    %c0_149 = arith.constant 0 : index
    %186 = vector.load %arg2[%c0_146, %c6_147, %c0_148, %c0_149] : memref<2x8x1x128xf32, #tpu.memory_space<vmem>>, vector<1x1x1x128xf32>
    %187 = vector.shape_cast %186 : vector<1x1x1x128xf32> to vector<1x128xf32>
    %c1_150 = arith.constant 1 : index
    %c6_151 = arith.constant 6 : index
    %c0_152 = arith.constant 0 : index
    %c0_153 = arith.constant 0 : index
    %188 = vector.load %arg2[%c1_150, %c6_151, %c0_152, %c0_153] : memref<2x8x1x128xf32, #tpu.memory_space<vmem>>, vector<1x1x1x128xf32>
    %189 = vector.shape_cast %188 : vector<1x1x1x128xf32> to vector<1x128xf32>
    %190 = vector.broadcast %187 : vector<1x128xf32> to vector<16x128xf32>
    %191 = arith.mulf %183, %190 : vector<16x128xf32>
    %192 = vector.broadcast %189 : vector<1x128xf32> to vector<16x128xf32>
    %193 = arith.mulf %185, %192 : vector<16x128xf32>
    %194 = arith.subf %191, %193 : vector<16x128xf32>
    %195 = vector.broadcast %189 : vector<1x128xf32> to vector<16x128xf32>
    %196 = arith.mulf %183, %195 : vector<16x128xf32>
    %197 = vector.broadcast %187 : vector<1x128xf32> to vector<16x128xf32>
    %198 = arith.mulf %185, %197 : vector<16x128xf32>
    %199 = arith.addf %196, %198 : vector<16x128xf32>
    %c0_154 = arith.constant 0 : index
    %c6_155 = arith.constant 6 : index
    %c0_156 = arith.constant 0 : index
    %c0_157 = arith.constant 0 : index
    %200 = vector.load %arg1[%c0_154, %c6_155, %c0_156, %c0_157] : memref<2x8x16x128xf32, #tpu.memory_space<vmem>>, vector<1x1x16x128xf32>
    %201 = vector.shape_cast %200 : vector<1x1x16x128xf32> to vector<16x128xf32>
    %c1_158 = arith.constant 1 : index
    %c6_159 = arith.constant 6 : index
    %c0_160 = arith.constant 0 : index
    %c0_161 = arith.constant 0 : index
    %202 = vector.load %arg1[%c1_158, %c6_159, %c0_160, %c0_161] : memref<2x8x16x128xf32, #tpu.memory_space<vmem>>, vector<1x1x16x128xf32>
    %203 = vector.shape_cast %202 : vector<1x1x16x128xf32> to vector<16x128xf32>
    %204 = arith.mulf %194, %201 : vector<16x128xf32>
    %205 = arith.mulf %199, %203 : vector<16x128xf32>
    %206 = arith.subf %204, %205 : vector<16x128xf32>
    %207 = arith.addf %177, %206 : vector<16x128xf32>
    %208 = arith.mulf %194, %203 : vector<16x128xf32>
    %209 = arith.mulf %199, %201 : vector<16x128xf32>
    %210 = arith.addf %208, %209 : vector<16x128xf32>
    %211 = arith.addf %181, %210 : vector<16x128xf32>
    %c0_162 = arith.constant 0 : index
    %c7 = arith.constant 7 : index
    %c0_163 = arith.constant 0 : index
    %c0_164 = arith.constant 0 : index
    %212 = vector.load %arg0[%c0_162, %c7, %c0_163, %c0_164] : memref<2x8x16x128xf32, #tpu.memory_space<vmem>>, vector<1x1x16x128xf32>
    %213 = vector.shape_cast %212 : vector<1x1x16x128xf32> to vector<16x128xf32>
    %c1_165 = arith.constant 1 : index
    %c7_166 = arith.constant 7 : index
    %c0_167 = arith.constant 0 : index
    %c0_168 = arith.constant 0 : index
    %214 = vector.load %arg0[%c1_165, %c7_166, %c0_167, %c0_168] : memref<2x8x16x128xf32, #tpu.memory_space<vmem>>, vector<1x1x16x128xf32>
    %215 = vector.shape_cast %214 : vector<1x1x16x128xf32> to vector<16x128xf32>
    %c0_169 = arith.constant 0 : index
    %c7_170 = arith.constant 7 : index
    %c0_171 = arith.constant 0 : index
    %c0_172 = arith.constant 0 : index
    %216 = vector.load %arg2[%c0_169, %c7_170, %c0_171, %c0_172] : memref<2x8x1x128xf32, #tpu.memory_space<vmem>>, vector<1x1x1x128xf32>
    %217 = vector.shape_cast %216 : vector<1x1x1x128xf32> to vector<1x128xf32>
    %c1_173 = arith.constant 1 : index
    %c7_174 = arith.constant 7 : index
    %c0_175 = arith.constant 0 : index
    %c0_176 = arith.constant 0 : index
    %218 = vector.load %arg2[%c1_173, %c7_174, %c0_175, %c0_176] : memref<2x8x1x128xf32, #tpu.memory_space<vmem>>, vector<1x1x1x128xf32>
    %219 = vector.shape_cast %218 : vector<1x1x1x128xf32> to vector<1x128xf32>
    %220 = vector.broadcast %217 : vector<1x128xf32> to vector<16x128xf32>
    %221 = arith.mulf %213, %220 : vector<16x128xf32>
    %222 = vector.broadcast %219 : vector<1x128xf32> to vector<16x128xf32>
    %223 = arith.mulf %215, %222 : vector<16x128xf32>
    %224 = arith.subf %221, %223 : vector<16x128xf32>
    %225 = vector.broadcast %219 : vector<1x128xf32> to vector<16x128xf32>
    %226 = arith.mulf %213, %225 : vector<16x128xf32>
    %227 = vector.broadcast %217 : vector<1x128xf32> to vector<16x128xf32>
    %228 = arith.mulf %215, %227 : vector<16x128xf32>
    %229 = arith.addf %226, %228 : vector<16x128xf32>
    %c0_177 = arith.constant 0 : index
    %c7_178 = arith.constant 7 : index
    %c0_179 = arith.constant 0 : index
    %c0_180 = arith.constant 0 : index
    %230 = vector.load %arg1[%c0_177, %c7_178, %c0_179, %c0_180] : memref<2x8x16x128xf32, #tpu.memory_space<vmem>>, vector<1x1x16x128xf32>
    %231 = vector.shape_cast %230 : vector<1x1x16x128xf32> to vector<16x128xf32>
    %c1_181 = arith.constant 1 : index
    %c7_182 = arith.constant 7 : index
    %c0_183 = arith.constant 0 : index
    %c0_184 = arith.constant 0 : index
    %232 = vector.load %arg1[%c1_181, %c7_182, %c0_183, %c0_184] : memref<2x8x16x128xf32, #tpu.memory_space<vmem>>, vector<1x1x16x128xf32>
    %233 = vector.shape_cast %232 : vector<1x1x16x128xf32> to vector<16x128xf32>
    %234 = arith.mulf %224, %231 : vector<16x128xf32>
    %235 = arith.mulf %229, %233 : vector<16x128xf32>
    %236 = arith.subf %234, %235 : vector<16x128xf32>
    %237 = arith.addf %207, %236 : vector<16x128xf32>
    %238 = arith.mulf %224, %233 : vector<16x128xf32>
    %239 = arith.mulf %229, %231 : vector<16x128xf32>
    %240 = arith.addf %238, %239 : vector<16x128xf32>
    %241 = arith.addf %211, %240 : vector<16x128xf32>
    %c0_185 = arith.constant 0 : index
    %c0_186 = arith.constant 0 : index
    %c0_187 = arith.constant 0 : index
    %242 = vector.load %arg3[%c0_185, %c0_186, %c0_187] : memref<2x16x128xf32, #tpu.memory_space<vmem>>, vector<1x16x128xf32>
    %243 = vector.shape_cast %242 : vector<1x16x128xf32> to vector<16x128xf32>
    %c1_188 = arith.constant 1 : index
    %c0_189 = arith.constant 0 : index
    %c0_190 = arith.constant 0 : index
    %244 = vector.load %arg3[%c1_188, %c0_189, %c0_190] : memref<2x16x128xf32, #tpu.memory_space<vmem>>, vector<1x16x128xf32>
    %245 = vector.shape_cast %244 : vector<1x16x128xf32> to vector<16x128xf32>
    %246 = arith.mulf %237, %243 : vector<16x128xf32>
    %247 = arith.mulf %241, %245 : vector<16x128xf32>
    %248 = arith.subf %246, %247 : vector<16x128xf32>
    %c0_191 = arith.constant 0 : index
    %c0_192 = arith.constant 0 : index
    %c0_193 = arith.constant 0 : index
    %249 = vector.load %arg4[%c0_191, %c0_192, %c0_193] : memref<2x16x128xf32, #tpu.memory_space<vmem>>, vector<1x16x128xf32>
    %250 = vector.shape_cast %249 : vector<1x16x128xf32> to vector<16x128xf32>
    %251 = vector.shape_cast %248 : vector<16x128xf32> to vector<1x16x128xf32>
    tpu.vector_store %arg4[%c0_191, %c0_192, %c0_193], %251 {strides = array<i32>} : memref<2x16x128xf32, #tpu.memory_space<vmem>>, vector<1x16x128xf32>,
    %252 = arith.mulf %237, %245 : vector<16x128xf32>
    %253 = arith.mulf %241, %243 : vector<16x128xf32>
    %254 = arith.addf %252, %253 : vector<16x128xf32>
    %c1_194 = arith.constant 1 : index
    %c0_195 = arith.constant 0 : index
    %c0_196 = arith.constant 0 : index
    %255 = vector.load %arg4[%c1_194, %c0_195, %c0_196] : memref<2x16x128xf32, #tpu.memory_space<vmem>>, vector<1x16x128xf32>
    %256 = vector.shape_cast %255 : vector<1x16x128xf32> to vector<16x128xf32>
    %257 = vector.shape_cast %254 : vector<16x128xf32> to vector<1x16x128xf32>
    tpu.vector_store %arg4[%c1_194, %c0_195, %c0_196], %257 {strides = array<i32>} : memref<2x16x128xf32, #tpu.memory_space<vmem>>, vector<1x16x128xf32>,
    return
  }
}

</mosaic_0001>

<llo_original>
// kernel: tpu_custom_call.1
$region0: #{tpu_custom_call.1}
  #allocation0 [shape = 'u32[]', space=smem, size = 0x4, offset = 0x4, fixed_abs, tag = 'smem constant byte address 0x4 - core index']
  #allocation1 [shape = 'u32[72,128]{1,0:T(1,128)}', space=vmem, size = 0x9000, scoped, tag = 'internal scratch']
  %s0 = inlined_call_operand.hbm [shape: f32[2,8,16,128], index: 0, kind: input, shape index: {}]
  %s1 = inlined_call_operand.hbm [shape: f32[2,8,16,128], index: 1, kind: input, shape index: {}]
  %s2 = inlined_call_operand.hbm [shape: f32[2,8,1,128], index: 2, kind: input, shape index: {}]
  %s3 = inlined_call_operand.hbm [shape: f32[2,16,128], index: 3, kind: input, shape index: {}]
  %s4 = inlined_call_operand.hbm [shape: f32[2,16,128], index: 4, kind: output, shape index: {}]
  %s5 = sld [smem:[#allocation0]]
  $region42: #{tpu_custom_call.1} parent=0
    _
  %s7 = ssub.s32 1, %s5
  %s8 = scalar_select 0, %s7, %s5
  $region1: #{tpu_custom_call.1} parent=0
    #allocation2 [shape = 'u8[131072]{0}', space=vmem, size = 0x20000, scoped, tag = 'input window, operand 0, single buffered']
    #allocation3 [shape = 's32[1]{0}', space=sflag, size = 0x4, scoped, tag = 'scoped memory for tpu_custom_call.1']
    #allocation4 [shape = 's32[1]{0}', space=sflag, size = 0x4, scoped, tag = 'scoped memory for tpu_custom_call.1']
    #allocation5 [shape = 'u8[131072]{0}', space=vmem, size = 0x20000, scoped, tag = 'input window, operand 1, single buffered']
    #allocation6 [shape = 's32[1]{0}', space=sflag, size = 0x4, scoped, tag = 'scoped memory for tpu_custom_call.1']
    #allocation7 [shape = 'u8[8192]{0}', space=vmem, size = 0x2000, scoped, tag = 'input window, operand 2, single buffered']
    #allocation8 [shape = 'u8[16384]{0}', space=vmem, size = 0x4000, scoped, tag = 'input window, operand 3, single buffered']
    #allocation9 [shape = 's32[1]{0}', space=sflag, size = 0x4, scoped, tag = 'scoped memory for tpu_custom_call.1']
    #allocation10 [shape = 'u8[16384]{0}', space=vmem, size = 0x4000, scoped, tag = 'output window, operand 0, single buffered']
    %9 = vsyncpa [#allocation3], 0
    %10 = vsyncpa [#allocation6], 0
    %11 = vsyncpa [#allocation9], 0
    %12 = vsyncpa [#allocation4], 0
    // Predicated region
    $region2: #{tpu_custom_call.1} parent=1 // pred_check
      _
    $region3: #{tpu_custom_call.1} parent=1 // pred_check_branch
      %14 = sbr.rel (0) target = $region5
    $region4: #{tpu_custom_call.1} parent=1 // pred_region
      %16 = vsyncadd [#allocation3], 0
      %s17 = sshll.u32 %s0, 4
      %s18 = int_to_ptr.hbm [resolvable:$true] %s17
      %s19 = sshll.u32 [#allocation2], 4
      %s20 = int_to_ptr.vmem [resolvable:$true] %s19
      %25 = dma.hbm_to_vmem [thread:$0]  %s18, 4096, %s20, [#allocation3], 128, 128, 8
    $region5: #{tpu_custom_call.1} parent=1 // pred_fallthru
      _
    // Predicated region
    $region6: #{tpu_custom_call.1} parent=1 // pred_check
      _
    $region7: #{tpu_custom_call.1} parent=1 // pred_check_branch
      %27 = sbr.rel (0) target = $region9
    $region8: #{tpu_custom_call.1} parent=1 // pred_region
      %29 = vsyncadd [#allocation6], 0
      %s30 = sshll.u32 %s1, 4
      %s31 = int_to_ptr.hbm [resolvable:$true] %s30
      %s32 = sshll.u32 [#allocation5], 4
      %s33 = int_to_ptr.vmem [resolvable:$true] %s32
      %38 = dma.hbm_to_vmem [thread:$0]  %s31, 4096, %s33, [#allocation6], 128, 128, 8
    $region9: #{tpu_custom_call.1} parent=1 // pred_fallthru
      _
    // Predicated region
    $region10: #{tpu_custom_call.1} parent=1 // pred_check
      _
    $region11: #{tpu_custom_call.1} parent=1 // pred_check_branch
      %40 = sbr.rel (0) target = $region13
    $region12: #{tpu_custom_call.1} parent=1 // pred_region
      %42 = vsyncadd [#allocation6], 0
      %s43 = sshll.u32 %s2, 4
      %s44 = int_to_ptr.hbm [resolvable:$true] %s43
      %s45 = sshll.u32 [#allocation7], 4
      %s46 = int_to_ptr.vmem [resolvable:$true] %s45
      %51 = dma.hbm_to_vmem [thread:$0]  %s44, 256, %s46, [#allocation6], 16, 16, 1
    $region13: #{tpu_custom_call.1} parent=1 // pred_fallthru
      _
    // Predicated region
    $region14: #{tpu_custom_call.1} parent=1 // pred_check
      _
    $region15: #{tpu_custom_call.1} parent=1 // pred_check_branch
      %53 = sbr.rel (0) target = $region17
    $region16: #{tpu_custom_call.1} parent=1 // pred_region
      %55 = vsyncadd [#allocation9], 0
      %s56 = sshll.u32 %s3, 4
      %s57 = int_to_ptr.hbm [resolvable:$true] %s56
      %s58 = sshll.u32 [#allocation8], 4
      %s59 = int_to_ptr.vmem [resolvable:$true] %s58
      %64 = dma.hbm_to_vmem [thread:$0]  %s57, 512, %s59, [#allocation9], 128, 128, 8
    $region17: #{tpu_custom_call.1} parent=1 // pred_fallthru
      _
    // Predicated region
    $region18: #{tpu_custom_call.1} parent=1 // pred_check
      _
    $region19: #{tpu_custom_call.1} parent=1 // pred_check_branch
      %66 = sbr.rel (0) target = $region21
    $region20: #{tpu_custom_call.1} parent=1 // pred_region
      %68 = dma.done [#allocation3], 4096
    $region21: #{tpu_custom_call.1} parent=1 // pred_fallthru
      _
    // Predicated region
    $region22: #{tpu_custom_call.1} parent=1 // pred_check
      _
    $region23: #{tpu_custom_call.1} parent=1 // pred_check_branch
      %70 = sbr.rel (0) target = $region25
    $region24: #{tpu_custom_call.1} parent=1 // pred_region
      %72 = dma.done [#allocation6], 4096
    $region25: #{tpu_custom_call.1} parent=1 // pred_fallthru
      _
    // Predicated region
    $region26: #{tpu_custom_call.1} parent=1 // pred_check
      _
    $region27: #{tpu_custom_call.1} parent=1 // pred_check_branch
      %74 = sbr.rel (0) target = $region29
    $region28: #{tpu_custom_call.1} parent=1 // pred_region
      %76 = dma.done [#allocation6], 256
    $region29: #{tpu_custom_call.1} parent=1 // pred_fallthru
      _
    // Predicated region
    $region30: #{tpu_custom_call.1} parent=1 // pred_check
      _
    $region31: #{tpu_custom_call.1} parent=1 // pred_check_branch
      %78 = sbr.rel (0) target = $region33
    $region32: #{tpu_custom_call.1} parent=1 // pred_region
      %80 = dma.done [#allocation9], 512
    $region33: #{tpu_custom_call.1} parent=1 // pred_fallthru
      _
    %v81 = vld [vmem:[#allocation2] sm:$0xff]
    %v82 = vld [vmem:[#allocation2 + $0x8] sm:$0xff]
    %s83 = scalar_lea.vmem [#allocation2], 128
    %v84 = vld [vmem:[%s83] sm:$0xff]
    %v85 = vld [vmem:[%s83 + $0x8] sm:$0xff]
    %v86 = vld [vmem:[#allocation7] sm:$0x1]
    %s87 = scalar_lea.vmem [#allocation7], 8
    %v88 = vld [vmem:[%s87] sm:$0x1]
    %v90 = vperm.slane %v86, 0
    %v92 = vmul.f32 %v81, %v90
    %v93 = vmul.f32 %v82, %v90
    %v95 = vperm.slane %v88, 0
    %v97 = vmul.f32 %v84, %v95
    %v98 = vmul.f32 %v85, %v95
    %v99 = vsub.f32 %v92, %v97
    %v100 = vsub.f32 %v93, %v98
    %v101 = vmul.f32 %v81, %v95
    %v102 = vmul.f32 %v82, %v95
    %v103 = vmul.f32 %v84, %v90
    %v104 = vmul.f32 %v85, %v90
    %v105 = vadd.f32 %v101, %v103
    %v106 = vadd.f32 %v102, %v104
    %v107 = vld [vmem:[#allocation5] sm:$0xff]
    %v108 = vld [vmem:[#allocation5 + $0x8] sm:$0xff]
    %s109 = scalar_lea.vmem [#allocation5], 128
    %v110 = vld [vmem:[%s109] sm:$0xff]
    %v111 = vld [vmem:[%s109 + $0x8] sm:$0xff]
    %v112 = vmul.f32 %v99, %v107
    %v113 = vmul.f32 %v100, %v108
    %v114 = vmul.f32 %v105, %v110
    %v115 = vmul.f32 %v106, %v111
    %v116 = vsub.f32 %v112, %v114
    %v117 = vsub.f32 %v113, %v115
    %v118 = vadd.f32 %v116, 0.0
    %v119 = vadd.f32 %v117, 0.0
    %v120 = vmul.f32 %v99, %v110
    %v121 = vmul.f32 %v100, %v111
    %v122 = vmul.f32 %v105, %v107
    %v123 = vmul.f32 %v106, %v108
    %v124 = vadd.f32 %v120, %v122
    %v125 = vadd.f32 %v121, %v123
    %v126 = vadd.f32 %v124, 0.0
    %v127 = vadd.f32 %v125, 0.0
    %s128 = scalar_lea.vmem [#allocation2], 16
    %v129 = vld [vmem:[%s128] sm:$0xff]
    %v130 = vld [vmem:[%s128 + $0x8] sm:$0xff]
    %s131 = scalar_lea.vmem [#allocation2], 144
    %v132 = vld [vmem:[%s131] sm:$0xff]
    %v133 = vld [vmem:[%s131 + $0x8] sm:$0xff]
    %s134 = scalar_lea.vmem [#allocation7], 1
    %v135 = vld [vmem:[%s134] sm:$0x1]
    %s136 = scalar_lea.vmem [#allocation7], 9
    %v137 = vld [vmem:[%s136] sm:$0x1]
    %v139 = vperm.slane %v135, 0
    %v141 = vmul.f32 %v129, %v139
    %v142 = vmul.f32 %v130, %v139
    %v144 = vperm.slane %v137, 0
    %v146 = vmul.f32 %v132, %v144
    %v147 = vmul.f32 %v133, %v144
    %v148 = vsub.f32 %v141, %v146
    %v149 = vsub.f32 %v142, %v147
    %v150 = vmul.f32 %v129, %v144
    %v151 = vmul.f32 %v130, %v144
    %v152 = vmul.f32 %v132, %v139
    %v153 = vmul.f32 %v133, %v139
    %v154 = vadd.f32 %v150, %v152
    %v155 = vadd.f32 %v151, %v153
    %s156 = scalar_lea.vmem [#allocation5], 16
    %v157 = vld [vmem:[%s156] sm:$0xff]
    %v158 = vld [vmem:[%s156 + $0x8] sm:$0xff]
    %s159 = scalar_lea.vmem [#allocation5], 144
    %v160 = vld [vmem:[%s159] sm:$0xff]
    %v161 = vld [vmem:[%s159 + $0x8] sm:$0xff]
    %v162 = vmul.f32 %v148, %v157
    %v163 = vmul.f32 %v149, %v158
    %v164 = vmul.f32 %v154, %v160
    %v165 = vmul.f32 %v155, %v161
    %v166 = vsub.f32 %v162, %v164
    %v167 = vsub.f32 %v163, %v165
    %v168 = vadd.f32 %v118, %v166
    %v169 = vadd.f32 %v119, %v167
    %v170 = vmul.f32 %v148, %v160
    %v171 = vmul.f32 %v149, %v161
    %v172 = vmul.f32 %v154, %v157
    %v173 = vmul.f32 %v155, %v158
    %v174 = vadd.f32 %v170, %v172
    %v175 = vadd.f32 %v171, %v173
    %v176 = vadd.f32 %v126, %v174
    %v177 = vadd.f32 %v127, %v175
    %s178 = scalar_lea.vmem [#allocation2], 32
    %v179 = vld [vmem:[%s178] sm:$0xff]
    %v180 = vld [vmem:[%s178 + $0x8] sm:$0xff]
    %s181 = scalar_lea.vmem [#allocation2], 160
    %v182 = vld [vmem:[%s181] sm:$0xff]
    %v183 = vld [vmem:[%s181 + $0x8] sm:$0xff]
    %s184 = scalar_lea.vmem [#allocation7], 2
    %v185 = vld [vmem:[%s184] sm:$0x1]
    %s186 = scalar_lea.vmem [#allocation7], 10
    %v187 = vld [vmem:[%s186] sm:$0x1]
    %v189 = vperm.slane %v185, 0
    %v191 = vmul.f32 %v179, %v189
    %v192 = vmul.f32 %v180, %v189
    %v194 = vperm.slane %v187, 0
    %v196 = vmul.f32 %v182, %v194
    %v197 = vmul.f32 %v183, %v194
    %v198 = vsub.f32 %v191, %v196
    %v199 = vsub.f32 %v192, %v197
    %v200 = vmul.f32 %v179, %v194
    %v201 = vmul.f32 %v180, %v194
    %v202 = vmul.f32 %v182, %v189
    %v203 = vmul.f32 %v183, %v189
    %v204 = vadd.f32 %v200, %v202
    %v205 = vadd.f32 %v201, %v203
    %s206 = scalar_lea.vmem [#allocation5], 32
    %v207 = vld [vmem:[%s206] sm:$0xff]
    %v208 = vld [vmem:[%s206 + $0x8] sm:$0xff]
    %s209 = scalar_lea.vmem [#allocation5], 160
    %v210 = vld [vmem:[%s209] sm:$0xff]
    %v211 = vld [vmem:[%s209 + $0x8] sm:$0xff]
    %v212 = vmul.f32 %v198, %v207
    %v213 = vmul.f32 %v199, %v208
    %v214 = vmul.f32 %v204, %v210
    %v215 = vmul.f32 %v205, %v211
    %v216 = vsub.f32 %v212, %v214
    %v217 = vsub.f32 %v213, %v215
    %v218 = vadd.f32 %v168, %v216
    %v219 = vadd.f32 %v169, %v217
    %v220 = vmul.f32 %v198, %v210
    %v221 = vmul.f32 %v199, %v211
    %v222 = vmul.f32 %v204, %v207
    %v223 = vmul.f32 %v205, %v208
    %v224 = vadd.f32 %v220, %v222
    %v225 = vadd.f32 %v221, %v223
    %v226 = vadd.f32 %v176, %v224
    %v227 = vadd.f32 %v177, %v225
    %s228 = scalar_lea.vmem [#allocation2], 48
    %v229 = vld [vmem:[%s228] sm:$0xff]
    %v230 = vld [vmem:[%s228 + $0x8] sm:$0xff]
    %s231 = scalar_lea.vmem [#allocation2], 176
    %v232 = vld [vmem:[%s231] sm:$0xff]
    %v233 = vld [vmem:[%s231 + $0x8] sm:$0xff]
    %s234 = scalar_lea.vmem [#allocation7], 3
    %v235 = vld [vmem:[%s234] sm:$0x1]
    %s236 = scalar_lea.vmem [#allocation7], 11
    %v237 = vld [vmem:[%s236] sm:$0x1]
    %v239 = vperm.slane %v235, 0
    %v241 = vmul.f32 %v229, %v239
    %v242 = vmul.f32 %v230, %v239
    %v244 = vperm.slane %v237, 0
    %v246 = vmul.f32 %v232, %v244
    %v247 = vmul.f32 %v233, %v244
    %v248 = vsub.f32 %v241, %v246
    %v249 = vsub.f32 %v242, %v247
    %v250 = vmul.f32 %v229, %v244
    %v251 = vmul.f32 %v230, %v244
    %v252 = vmul.f32 %v232, %v239
    %v253 = vmul.f32 %v233, %v239
    %v254 = vadd.f32 %v250, %v252
    %v255 = vadd.f32 %v251, %v253
    %s256 = scalar_lea.vmem [#allocation5], 48
    %v257 = vld [vmem:[%s256] sm:$0xff]
    %v258 = vld [vmem:[%s256 + $0x8] sm:$0xff]
    %s259 = scalar_lea.vmem [#allocation5], 176
    %v260 = vld [vmem:[%s259] sm:$0xff]
    %v261 = vld [vmem:[%s259 + $0x8] sm:$0xff]
    %v262 = vmul.f32 %v248, %v257
    %v263 = vmul.f32 %v249, %v258
    %v264 = vmul.f32 %v254, %v260
    %v265 = vmul.f32 %v255, %v261
    %v266 = vsub.f32 %v262, %v264
    %v267 = vsub.f32 %v263, %v265
    %v268 = vadd.f32 %v218, %v266
    %v269 = vadd.f32 %v219, %v267
    %v270 = vmul.f32 %v248, %v260
    %v271 = vmul.f32 %v249, %v261
    %v272 = vmul.f32 %v254, %v257
    %v273 = vmul.f32 %v255, %v258
    %v274 = vadd.f32 %v270, %v272
    %v275 = vadd.f32 %v271, %v273
    %v276 = vadd.f32 %v226, %v274
    %v277 = vadd.f32 %v227, %v275
    %s278 = scalar_lea.vmem [#allocation2], 64
    %v279 = vld [vmem:[%s278] sm:$0xff]
    %v280 = vld [vmem:[%s278 + $0x8] sm:$0xff]
    %s281 = scalar_lea.vmem [#allocation2], 192
    %v282 = vld [vmem:[%s281] sm:$0xff]
    %v283 = vld [vmem:[%s281 + $0x8] sm:$0xff]
    %s284 = scalar_lea.vmem [#allocation7], 4
    %v285 = vld [vmem:[%s284] sm:$0x1]
    %s286 = scalar_lea.vmem [#allocation7], 12
    %v287 = vld [vmem:[%s286] sm:$0x1]
    %v289 = vperm.slane %v285, 0
    %v291 = vmul.f32 %v279, %v289
    %v292 = vmul.f32 %v280, %v289
    %v294 = vperm.slane %v287, 0
    %v296 = vmul.f32 %v282, %v294
    %v297 = vmul.f32 %v283, %v294
    %v298 = vsub.f32 %v291, %v296
    %v299 = vsub.f32 %v292, %v297
    %v300 = vmul.f32 %v279, %v294
    %v301 = vmul.f32 %v280, %v294
    %v302 = vmul.f32 %v282, %v289
    %v303 = vmul.f32 %v283, %v289
    %v304 = vadd.f32 %v300, %v302
    %v305 = vadd.f32 %v301, %v303
    %s306 = scalar_lea.vmem [#allocation5], 64
    %v307 = vld [vmem:[%s306] sm:$0xff]
    %v308 = vld [vmem:[%s306 + $0x8] sm:$0xff]
    %s309 = scalar_lea.vmem [#allocation5], 192
    %v310 = vld [vmem:[%s309] sm:$0xff]
    %v311 = vld [vmem:[%s309 + $0x8] sm:$0xff]
    %v312 = vmul.f32 %v298, %v307
    %v313 = vmul.f32 %v299, %v308
    %v314 = vmul.f32 %v304, %v310
    %v315 = vmul.f32 %v305, %v311
    %v316 = vsub.f32 %v312, %v314
    %v317 = vsub.f32 %v313, %v315
    %v318 = vadd.f32 %v268, %v316
    %v319 = vadd.f32 %v269, %v317
    %v320 = vmul.f32 %v298, %v310
    %v321 = vmul.f32 %v299, %v311
    %v322 = vmul.f32 %v304, %v307
    %v323 = vmul.f32 %v305, %v308
    %v324 = vadd.f32 %v320, %v322
    %v325 = vadd.f32 %v321, %v323
    %v326 = vadd.f32 %v276, %v324
    %v327 = vadd.f32 %v277, %v325
    %s328 = scalar_lea.vmem [#allocation2], 80
    %v329 = vld [vmem:[%s328] sm:$0xff]
    %v330 = vld [vmem:[%s328 + $0x8] sm:$0xff]
    %s331 = scalar_lea.vmem [#allocation2], 208
    %v332 = vld [vmem:[%s331] sm:$0xff]
    %v333 = vld [vmem:[%s331 + $0x8] sm:$0xff]
    %s334 = scalar_lea.vmem [#allocation7], 5
    %v335 = vld [vmem:[%s334] sm:$0x1]
    %s336 = scalar_lea.vmem [#allocation7], 13
    %v337 = vld [vmem:[%s336] sm:$0x1]
    %v339 = vperm.slane %v335, 0
    %v341 = vmul.f32 %v329, %v339
    %v342 = vmul.f32 %v330, %v339
    %v344 = vperm.slane %v337, 0
    %v346 = vmul.f32 %v332, %v344
    %v347 = vmul.f32 %v333, %v344
    %v348 = vsub.f32 %v341, %v346
    %v349 = vsub.f32 %v342, %v347
    %v350 = vmul.f32 %v329, %v344
    %v351 = vmul.f32 %v330, %v344
    %v352 = vmul.f32 %v332, %v339
    %v353 = vmul.f32 %v333, %v339
    %v354 = vadd.f32 %v350, %v352
    %v355 = vadd.f32 %v351, %v353
    %s356 = scalar_lea.vmem [#allocation5], 80
    %v357 = vld [vmem:[%s356] sm:$0xff]
    %v358 = vld [vmem:[%s356 + $0x8] sm:$0xff]
    %s359 = scalar_lea.vmem [#allocation5], 208
    %v360 = vld [vmem:[%s359] sm:$0xff]
    %v361 = vld [vmem:[%s359 + $0x8] sm:$0xff]
    %v362 = vmul.f32 %v348, %v357
    %v363 = vmul.f32 %v349, %v358
    %v364 = vmul.f32 %v354, %v360
    %v365 = vmul.f32 %v355, %v361
    %v366 = vsub.f32 %v362, %v364
    %v367 = vsub.f32 %v363, %v365
    %v368 = vadd.f32 %v318, %v366
    %v369 = vadd.f32 %v319, %v367
    %v370 = vmul.f32 %v348, %v360
    %v371 = vmul.f32 %v349, %v361
    %v372 = vmul.f32 %v354, %v357
    %v373 = vmul.f32 %v355, %v358
    %v374 = vadd.f32 %v370, %v372
    %v375 = vadd.f32 %v371, %v373
    %v376 = vadd.f32 %v326, %v374
    %v377 = vadd.f32 %v327, %v375
    %s378 = scalar_lea.vmem [#allocation2], 96
    %v379 = vld [vmem:[%s378] sm:$0xff]
    %v380 = vld [vmem:[%s378 + $0x8] sm:$0xff]
    %s381 = scalar_lea.vmem [#allocation2], 224
    %v382 = vld [vmem:[%s381] sm:$0xff]
    %v383 = vld [vmem:[%s381 + $0x8] sm:$0xff]
    %s384 = scalar_lea.vmem [#allocation7], 6
    %v385 = vld [vmem:[%s384] sm:$0x1]
    %s386 = scalar_lea.vmem [#allocation7], 14
    %v387 = vld [vmem:[%s386] sm:$0x1]
    %v389 = vperm.slane %v385, 0
    %v391 = vmul.f32 %v379, %v389
    %v392 = vmul.f32 %v380, %v389
    %v394 = vperm.slane %v387, 0
    %v396 = vmul.f32 %v382, %v394
    %v397 = vmul.f32 %v383, %v394
    %v398 = vsub.f32 %v391, %v396
    %v399 = vsub.f32 %v392, %v397
    %v400 = vmul.f32 %v379, %v394
    %v401 = vmul.f32 %v380, %v394
    %v402 = vmul.f32 %v382, %v389
    %v403 = vmul.f32 %v383, %v389
    %v404 = vadd.f32 %v400, %v402
    %v405 = vadd.f32 %v401, %v403
    %s406 = scalar_lea.vmem [#allocation5], 96
    %v407 = vld [vmem:[%s406] sm:$0xff]
    %v408 = vld [vmem:[%s406 + $0x8] sm:$0xff]
    %s409 = scalar_lea.vmem [#allocation5], 224
    %v410 = vld [vmem:[%s409] sm:$0xff]
    %v411 = vld [vmem:[%s409 + $0x8] sm:$0xff]
    %v412 = vmul.f32 %v398, %v407
    %v413 = vmul.f32 %v399, %v408
    %v414 = vmul.f32 %v404, %v410
    %v415 = vmul.f32 %v405, %v411
    %v416 = vsub.f32 %v412, %v414
    %v417 = vsub.f32 %v413, %v415
    %v418 = vadd.f32 %v368, %v416
    %v419 = vadd.f32 %v369, %v417
    %v420 = vmul.f32 %v398, %v410
    %v421 = vmul.f32 %v399, %v411
    %v422 = vmul.f32 %v404, %v407
    %v423 = vmul.f32 %v405, %v408
    %v424 = vadd.f32 %v420, %v422
    %v425 = vadd.f32 %v421, %v423
    %v426 = vadd.f32 %v376, %v424
    %v427 = vadd.f32 %v377, %v425
    %s428 = scalar_lea.vmem [#allocation2], 112
    %v429 = vld [vmem:[%s428] sm:$0xff]
    %v430 = vld [vmem:[%s428 + $0x8] sm:$0xff]
    %s431 = scalar_lea.vmem [#allocation2], 240
    %v432 = vld [vmem:[%s431] sm:$0xff]
    %v433 = vld [vmem:[%s431 + $0x8] sm:$0xff]
    %s434 = scalar_lea.vmem [#allocation7], 7
    %v435 = vld [vmem:[%s434] sm:$0x1]
    %s436 = scalar_lea.vmem [#allocation7], 15
    %v437 = vld [vmem:[%s436] sm:$0x1]
    %v439 = vperm.slane %v435, 0
    %v441 = vmul.f32 %v429, %v439
    %v442 = vmul.f32 %v430, %v439
    %v444 = vperm.slane %v437, 0
    %v446 = vmul.f32 %v432, %v444
    %v447 = vmul.f32 %v433, %v444
    %v448 = vsub.f32 %v441, %v446
    %v449 = vsub.f32 %v442, %v447
    %v450 = vmul.f32 %v429, %v444
    %v451 = vmul.f32 %v430, %v444
    %v452 = vmul.f32 %v432, %v439
    %v453 = vmul.f32 %v433, %v439
    %v454 = vadd.f32 %v450, %v452
    %v455 = vadd.f32 %v451, %v453
    %s456 = scalar_lea.vmem [#allocation5], 112
    %v457 = vld [vmem:[%s456] sm:$0xff]
    %v458 = vld [vmem:[%s456 + $0x8] sm:$0xff]
    %s459 = scalar_lea.vmem [#allocation5], 240
    %v460 = vld [vmem:[%s459] sm:$0xff]
    %v461 = vld [vmem:[%s459 + $0x8] sm:$0xff]
    %v462 = vmul.f32 %v448, %v457
    %v463 = vmul.f32 %v449, %v458
    %v464 = vmul.f32 %v454, %v460
    %v465 = vmul.f32 %v455, %v461
    %v466 = vsub.f32 %v462, %v464
    %v467 = vsub.f32 %v463, %v465
    %v468 = vadd.f32 %v418, %v466
    %v469 = vadd.f32 %v419, %v467
    %v470 = vmul.f32 %v448, %v460
    %v471 = vmul.f32 %v449, %v461
    %v472 = vmul.f32 %v454, %v457
    %v473 = vmul.f32 %v455, %v458
    %v474 = vadd.f32 %v470, %v472
    %v475 = vadd.f32 %v471, %v473
    %v476 = vadd.f32 %v426, %v474
    %v477 = vadd.f32 %v427, %v475
    %v478 = vld [vmem:[#allocation8] sm:$0xff]
    %v479 = vld [vmem:[#allocation8 + $0x8] sm:$0xff]
    %s480 = scalar_lea.vmem [#allocation8], 16
    %v481 = vld [vmem:[%s480] sm:$0xff]
    %v482 = vld [vmem:[%s480 + $0x8] sm:$0xff]
    %v483 = vmul.f32 %v468, %v478
    %v484 = vmul.f32 %v469, %v479
    %v485 = vmul.f32 %v476, %v481
    %v486 = vmul.f32 %v477, %v482
    %v487 = vsub.f32 %v483, %v485
    %v488 = vsub.f32 %v484, %v486
    %489 = vst [vmem:[#allocation10] sm:$0xff] %v487
    %490 = vst [vmem:[#allocation10 + $0x8] sm:$0xff] %v488
    %v491 = vmul.f32 %v468, %v481
    %v492 = vmul.f32 %v469, %v482
    %v493 = vmul.f32 %v476, %v478
    %v494 = vmul.f32 %v477, %v479
    %v495 = vadd.f32 %v491, %v493
    %v496 = vadd.f32 %v492, %v494
    %s497 = scalar_lea.vmem [#allocation10], 16
    %498 = vst [vmem:[%s497] sm:$0xff] %v495
    %499 = vst [vmem:[%s497 + $0x8] sm:$0xff] %v496
    // Predicated region
    $region34: #{tpu_custom_call.1} parent=1 // pred_check
      _
    $region35: #{tpu_custom_call.1} parent=1 // pred_check_branch
      %501 = sbr.rel (0) target = $region37
    $region36: #{tpu_custom_call.1} parent=1 // pred_region
      %503 = vsyncadd [#allocation4], 0
      %s504 = sshll.u32 [#allocation10], 4
      %s505 = int_to_ptr.vmem [resolvable:$true] %s504
      %s506 = sshll.u32 %s4, 4
      %s507 = int_to_ptr.hbm [resolvable:$true] %s506
      %512 = dma.vmem_to_hbm [thread:$0]  %s505, 512, %s507, [#allocation4], 128, 128, 8
    $region37: #{tpu_custom_call.1} parent=1 // pred_fallthru
      _
    // Predicated region
    $region38: #{tpu_custom_call.1} parent=1 // pred_check
      _
    $region39: #{tpu_custom_call.1} parent=1 // pred_check_branch
      %514 = sbr.rel (0) target = $region41
    $region40: #{tpu_custom_call.1} parent=1 // pred_region
      %516 = dma.done [#allocation4], 512
    $region41: #{tpu_custom_call.1} parent=1 // pred_fallthru
      _
    %517 = vsyncpa [#allocation3], 1
    %518 = vsyncpa [#allocation6], 1
    %519 = vsyncpa [#allocation9], 1
    %520 = vsyncpa [#allocation4], 1

</llo_original>
